<compile_context>
chip_gen: v6e
topology: v6e:2x2x1
jax: 0.10.0
libtpu: 0.0.40
codegen_flags: <defaults>
</compile_context>

<pallas_src>
import math

import jax
import jax.numpy as jnp
from jax.experimental import pallas as pl
from jax.experimental.pallas import tpu as pltpu


def _projection_kernel(mu_ref, lv_ref, w1_ref, w2_ref, zm_ref, zlv_ref):
    # mu_ref / lv_ref / zm_ref / zlv_ref: (TM, C) tiles.
    # w1_ref / w2_ref: (1, C) float32, broadcast along rows.
    scale = jnp.exp(w1_ref[...])          # tiny (1, C); EUP
    shift = w2_ref[...]
    zm_ref[...] = (mu_ref[...].astype(jnp.float32) * scale).astype(zm_ref.dtype)
    zlv_ref[...] = (lv_ref[...].astype(jnp.float32) + shift).astype(zlv_ref.dtype)


def projection(mu, logvar, W1, W2):
    """Pallas implementation of Projection.forward: (mu * exp(W1), logvar + W2)."""
    assert mu.shape == logvar.shape
    L = mu.shape[-1]
    lead = mu.shape[:-1]
    R = math.prod(lead) if lead else 1

    mu2 = mu.reshape(R, L)
    lv2 = logvar.reshape(R, L)
    w1 = jnp.asarray(W1, jnp.float32).reshape(1, L)
    w2 = jnp.asarray(W2, jnp.float32).reshape(1, L)

    # --- lane packing: fold k rows into the lane axis so the last dim is a multiple of 128.
    k = 128 // math.gcd(L, 128)
    if k > 1 and R % k == 0:
        R2, C2 = R // k, k * L
        mu2 = mu2.reshape(R2, C2)          # free row-major reshape
        lv2 = lv2.reshape(R2, C2)
        w1t = jnp.tile(w1, (1, k))          # tiny (1, k*L)
        w2t = jnp.tile(w2, (1, k))
    else:
        R2, C2 = R, L
        w1t, w2t = w1, w2

    # --- row tile: whole array if small, else ~1 MiB f32 tiles (multiple of 8 rows).
    bytes_per_row = C2 * 4
    target_rows = max(8, (1 << 20) // bytes_per_row)
    if R2 <= target_rows:
        TM = R2                              # full extent -> no (8,128) divisibility needed
    else:
        TM = max(8, (target_rows // 8) * 8)  # multiple of 8 sublanes
    grid = (pl.cdiv(R2, TM),)

    row_spec = pl.BlockSpec((TM, C2), lambda i: (i, 0))
    par_spec = pl.BlockSpec((1, C2), lambda i: (0, 0))

    z_mean, z_logvar = pl.pallas_call(
        _projection_kernel,
        out_shape=(
            jax.ShapeDtypeStruct((R2, C2), mu.dtype),
            jax.ShapeDtypeStruct((R2, C2), logvar.dtype),
        ),
        grid=grid,
        in_specs=[row_spec, row_spec, par_spec, par_spec],
        out_specs=(row_spec, row_spec),
        compiler_params=pltpu.CompilerParams(
            dimension_semantics=("parallel",),
        ),
    )(mu2, lv2, w1t, w2t)

    return z_mean.reshape(mu.shape), z_logvar.reshape(logvar.shape)


def _projection_ref(mu, logvar, W1, W2):
    # Pure-JAX reference replicating the torch module.
    return mu * jnp.exp(W1), logvar + W2


if __name__ == "__main__":
    key = jax.random.PRNGKey(0)
    k1, k2, k3, k4, k5, k6 = jax.random.split(key, 6)

    # --- case 1: batch=8, num_latent=32 (lane-packed path: (8,32) -> (2,128)) ---
    B1, L1 = 8, 32
    mu1 = jax.random.normal(k1, (B1, L1), dtype=jnp.float32)
    lv1 = jax.random.normal(k2, (B1, L1), dtype=jnp.float32)
    W1a = 0.1 * jax.random.normal(k3, (1, L1), dtype=jnp.float32)
    W2a = 0.1 * jax.random.normal(k4, (1, L1), dtype=jnp.float32)
    zm1, zlv1 = projection(mu1, lv1, W1a, W2a)
    zm1 = jax.block_until_ready(zm1)
    zlv1 = jax.block_until_ready(zlv1)
    rm1, rlv1 = _projection_ref(mu1, lv1, W1a, W2a)
    assert zm1.shape == mu1.shape and zm1.dtype == mu1.dtype
    assert zlv1.shape == lv1.shape and zlv1.dtype == lv1.dtype
    assert jnp.allclose(zm1, rm1, atol=1e-5, rtol=1e-5)
    assert jnp.allclose(zlv1, rlv1, atol=1e-5, rtol=1e-5)

    # --- case 2: batch=2, num_latent=10 (fallback path, zero-initialized params as in __init__) ---
    B2, L2 = 2, 10
    mu2 = jax.random.normal(k5, (B2, L2), dtype=jnp.float32)
    lv2 = jax.random.normal(k6, (B2, L2), dtype=jnp.float32)
    W1b = jnp.zeros((1, L2), dtype=jnp.float32)
    W2b = jnp.zeros((1, L2), dtype=jnp.float32)
    zm2, zlv2 = projection(mu2, lv2, W1b, W2b)
    zm2 = jax.block_until_ready(zm2)
    zlv2 = jax.block_until_ready(zlv2)
    rm2, rlv2 = _projection_ref(mu2, lv2, W1b, W2b)
    assert jnp.allclose(zm2, rm2, atol=1e-5, rtol=1e-5)
    assert jnp.allclose(zlv2, rlv2, atol=1e-5, rtol=1e-5)

    print("KERNEL_OK")
</pallas_src>

<mosaic_0001>
module attributes {stable_mosaic.version = 11 : i64} {
  func.func @_projection_kernel(%arg0: i32, %arg1: memref<2x128xf32, #tpu.memory_space<vmem>>, %arg2: memref<2x128xf32, #tpu.memory_space<vmem>>, %arg3: memref<1x128xf32, #tpu.memory_space<vmem>>, %arg4: memref<1x128xf32, #tpu.memory_space<vmem>>, %arg5: memref<2x128xf32, #tpu.memory_space<vmem>>, %arg6: memref<2x128xf32, #tpu.memory_space<vmem>>) attributes {dimension_semantics = [#tpu.dimension_semantics<parallel>], iteration_bounds = array<i64: 1>, scalar_prefetch = 0 : i64, scratch_operands = 0 : i64, tpu.core_type = #tpu.core_type<tc>, window_params = [{transform_indices = @transform_0, window_bounds = array<i64: 2, 128>}, {transform_indices = @transform_1, window_bounds = array<i64: 2, 128>}, {pipeline_mode = #tpu.pipeline_mode<synchronous>, transform_indices = @transform_2, window_bounds = array<i64: 1, 128>}, {pipeline_mode = #tpu.pipeline_mode<synchronous>, transform_indices = @transform_3, window_bounds = array<i64: 1, 128>}, {transform_indices = @transform_4, window_bounds = array<i64: 2, 128>}, {transform_indices = @transform_5, window_bounds = array<i64: 2, 128>}]} {
    %c0 = arith.constant 0 : index
    %c0_0 = arith.constant 0 : index
    %0 = vector.load %arg3[%c0, %c0_0] : memref<1x128xf32, #tpu.memory_space<vmem>>, vector<1x128xf32>
    %1 = math.exp %0 : vector<1x128xf32>
    %c0_1 = arith.constant 0 : index
    %c0_2 = arith.constant 0 : index
    %2 = vector.load %arg4[%c0_1, %c0_2] : memref<1x128xf32, #tpu.memory_space<vmem>>, vector<1x128xf32>
    %c0_3 = arith.constant 0 : index
    %c0_4 = arith.constant 0 : index
    %3 = vector.load %arg1[%c0_3, %c0_4] : memref<2x128xf32, #tpu.memory_space<vmem>>, vector<2x128xf32>
    %4 = vector.broadcast %1 : vector<1x128xf32> to vector<2x128xf32>
    %5 = arith.mulf %3, %4 : vector<2x128xf32>
    %c0_5 = arith.constant 0 : index
    %c0_6 = arith.constant 0 : index
    %6 = vector.load %arg5[%c0_5, %c0_6] : memref<2x128xf32, #tpu.memory_space<vmem>>, vector<2x128xf32>
    tpu.vector_store %arg5[%c0_5, %c0_6], %5 {strides = array<i32>} : memref<2x128xf32, #tpu.memory_space<vmem>>, vector<2x128xf32>,
    %c0_7 = arith.constant 0 : index
    %c0_8 = arith.constant 0 : index
    %7 = vector.load %arg2[%c0_7, %c0_8] : memref<2x128xf32, #tpu.memory_space<vmem>>, vector<2x128xf32>
    %8 = vector.broadcast %2 : vector<1x128xf32> to vector<2x128xf32>
    %9 = arith.addf %7, %8 : vector<2x128xf32>
    %c0_9 = arith.constant 0 : index
    %c0_10 = arith.constant 0 : index
    %10 = vector.load %arg6[%c0_9, %c0_10] : memref<2x128xf32, #tpu.memory_space<vmem>>, vector<2x128xf32>
    tpu.vector_store %arg6[%c0_9, %c0_10], %9 {strides = array<i32>} : memref<2x128xf32, #tpu.memory_space<vmem>>, vector<2x128xf32>,
    return
  }
  func.func @transform_0(%arg0: i32) -> (i32, i32) {
    %c0_i32 = arith.constant 0 : i32
    %c0_i32_0 = arith.constant 0 : i32
    return %arg0, %c0_i32 : i32, i32
  }
  func.func @transform_1(%arg0: i32) -> (i32, i32) {
    %c0_i32 = arith.constant 0 : i32
    %c0_i32_0 = arith.constant 0 : i32
    return %arg0, %c0_i32 : i32, i32
  }
  func.func @transform_2(%arg0: i32) -> (i32, i32) {
    %c0_i32 = arith.constant 0 : i32
    %c0_i32_0 = arith.constant 0 : i32
    %c0_i32_1 = arith.constant 0 : i32
    return %c0_i32, %c0_i32_0 : i32, i32
  }
  func.func @transform_3(%arg0: i32) -> (i32, i32) {
    %c0_i32 = arith.constant 0 : i32
    %c0_i32_0 = arith.constant 0 : i32
    %c0_i32_1 = arith.constant 0 : i32
    return %c0_i32, %c0_i32_0 : i32, i32
  }
  func.func @transform_4(%arg0: i32) -> (i32, i32) {
    %c0_i32 = arith.constant 0 : i32
    %c0_i32_0 = arith.constant 0 : i32
    return %arg0, %c0_i32 : i32, i32
  }
  func.func @transform_5(%arg0: i32) -> (i32, i32) {
    %c0_i32 = arith.constant 0 : i32
    %c0_i32_0 = arith.constant 0 : i32
    return %arg0, %c0_i32 : i32, i32
  }
}

</mosaic_0001>

<llo_original>
// kernel: tpu_custom_call.1
$region0: #{tpu_custom_call.1}
  #allocation0 [shape = 'u32[]', space=smem, size = 0x4, offset = 0x4, fixed_abs, tag = 'smem constant byte address 0x4 - core index']
  #allocation1 [shape = 'u32[144,128]{1,0:T(1,128)}', space=vmem, size = 0x12000, scoped, tag = 'internal scratch']
  %s0 = inlined_call_operand.hbm [shape: f32[2,128], index: 0, kind: input, shape index: {}]
  %s1 = inlined_call_operand.hbm [shape: f32[2,128], index: 1, kind: input, shape index: {}]
  %s2 = inlined_call_operand.vmem [shape: f32[1,128], index: 2, kind: input, shape index: {}]
  %s3 = inlined_call_operand.vmem [shape: f32[1,128], index: 3, kind: input, shape index: {}]
  %s4 = inlined_call_operand.hbm [shape: f32[2,128], index: 4, kind: output, shape index: {0}]
  %s5 = inlined_call_operand.hbm [shape: f32[2,128], index: 5, kind: output, shape index: {1}]
  %6 = xla_tuple %s4, %s5
  %s7 = sld [smem:[#allocation0]]
  $region42: #{tpu_custom_call.1} parent=0
    _
  %s9 = ssub.s32 1, %s7
  %s10 = scalar_select 0, %s9, %s7
  $region1: #{tpu_custom_call.1} parent=0
    #allocation2 [shape = 'u8[1024]{0}', space=vmem, size = 0x400, scoped, tag = 'input window, operand 0, single buffered']
    #allocation3 [shape = 's32[1]{0}', space=sflag, size = 0x4, scoped, tag = 'scoped memory for tpu_custom_call.1']
    #allocation4 [shape = 's32[1]{0}', space=sflag, size = 0x4, scoped, tag = 'scoped memory for tpu_custom_call.1']
    #allocation5 [shape = 'u8[1024]{0}', space=vmem, size = 0x400, scoped, tag = 'input window, operand 1, single buffered']
    #allocation6 [shape = 's32[1]{0}', space=sflag, size = 0x4, scoped, tag = 'scoped memory for tpu_custom_call.1']
    #allocation7 [shape = 'u8[1024]{0}', space=vmem, size = 0x400, scoped, tag = 'output window, operand 0, single buffered']
    #allocation8 [shape = 'u8[1024]{0}', space=vmem, size = 0x400, scoped, tag = 'output window, operand 1, single buffered']
    #allocation9 [shape = 's32[1]{0}', space=sflag, size = 0x4, scoped, tag = 'scoped memory for tpu_custom_call.1']
    %11 = vsyncpa [#allocation3], 0
    %12 = vsyncpa [#allocation6], 0
    %13 = vsyncpa [#allocation4], 0
    %14 = vsyncpa [#allocation9], 0
    // Predicated region
    $region2: #{tpu_custom_call.1} parent=1 // pred_check
      _
    $region3: #{tpu_custom_call.1} parent=1 // pred_check_branch
      %16 = sbr.rel (0) target = $region5
    $region4: #{tpu_custom_call.1} parent=1 // pred_region
      %s18 = ssub.s32 32, 32
      %19 = vsyncadd [#allocation3], %s18
      %s21 = sshll.u32 [#allocation2], 4
      %s22 = int_to_ptr.vmem [resolvable:$true] %s21
      %24 = dma.hbm_to_vmem [thread:$0]  %s0, 32, %s22, [#allocation3]
    $region5: #{tpu_custom_call.1} parent=1 // pred_fallthru
      _
    // Predicated region
    $region6: #{tpu_custom_call.1} parent=1 // pred_check
      _
    $region7: #{tpu_custom_call.1} parent=1 // pred_check_branch
      %26 = sbr.rel (0) target = $region9
    $region8: #{tpu_custom_call.1} parent=1 // pred_region
      %s28 = ssub.s32 32, 32
      %29 = vsyncadd [#allocation6], %s28
      %s31 = sshll.u32 [#allocation5], 4
      %s32 = int_to_ptr.vmem [resolvable:$true] %s31
      %34 = dma.hbm_to_vmem [thread:$0]  %s1, 32, %s32, [#allocation6]
    $region9: #{tpu_custom_call.1} parent=1 // pred_fallthru
      _
    // Predicated region
    $region10: #{tpu_custom_call.1} parent=1 // pred_check
      _
    $region11: #{tpu_custom_call.1} parent=1 // pred_check_branch
      %36 = sbr.rel (0) target = $region13
    $region12: #{tpu_custom_call.1} parent=1 // pred_region
      _
    $region13: #{tpu_custom_call.1} parent=1 // pred_fallthru
      _
    // Predicated region
    $region14: #{tpu_custom_call.1} parent=1 // pred_check
      _
    $region15: #{tpu_custom_call.1} parent=1 // pred_check_branch
      %38 = sbr.rel (0) target = $region17
    $region16: #{tpu_custom_call.1} parent=1 // pred_region
      _
    $region17: #{tpu_custom_call.1} parent=1 // pred_fallthru
      _
    // Predicated region
    $region18: #{tpu_custom_call.1} parent=1 // pred_check
      _
    $region19: #{tpu_custom_call.1} parent=1 // pred_check_branch
      %40 = sbr.rel (0) target = $region21
    $region20: #{tpu_custom_call.1} parent=1 // pred_region
      %41 = dma.done [#allocation3], 32
    $region21: #{tpu_custom_call.1} parent=1 // pred_fallthru
      _
    // Predicated region
    $region22: #{tpu_custom_call.1} parent=1 // pred_check
      _
    $region23: #{tpu_custom_call.1} parent=1 // pred_check_branch
      %43 = sbr.rel (0) target = $region25
    $region24: #{tpu_custom_call.1} parent=1 // pred_region
      %44 = dma.done [#allocation6], 32
    $region25: #{tpu_custom_call.1} parent=1 // pred_fallthru
      _
    %v45 = vld [vmem:[%s2] sm:$0x1]
    %v46 = vmul.f32 %v45, 1.442695
    %v47 = vpow.pop %v46
    %v48 = vld [vmem:[%s3] sm:$0x1]
    %v49 = vld [vmem:[#allocation2] sm:$0x3]
    %v51 = vlaneseq
    %v52 = vshrl.u32 %v51, 7
    %v53 = vsub.s32 0, %v52
    %v54 = vrot.slane %v47, %v53
    %v56 = vmul.f32 %v49, %v54
    %57 = vst [vmem:[#allocation7] sm:$0x3] %v56
    %v58 = vld [vmem:[#allocation5] sm:$0x3]
    %v60 = vlaneseq
    %v61 = vshrl.u32 %v60, 7
    %v62 = vsub.s32 0, %v61
    %v63 = vrot.slane %v48, %v62
    %v65 = vadd.f32 %v58, %v63
    %66 = vst [vmem:[#allocation8] sm:$0x3] %v65
    // Predicated region
    $region26: #{tpu_custom_call.1} parent=1 // pred_check
      _
    $region27: #{tpu_custom_call.1} parent=1 // pred_check_branch
      %68 = sbr.rel (0) target = $region29
    $region28: #{tpu_custom_call.1} parent=1 // pred_region
      %s70 = ssub.s32 32, 32
      %71 = vsyncadd [#allocation4], %s70
      %s73 = sshll.u32 [#allocation7], 4
      %s74 = int_to_ptr.vmem [resolvable:$true] %s73
      %76 = dma.vmem_to_hbm [thread:$0]  %s74, 32, %s4, [#allocation4]
    $region29: #{tpu_custom_call.1} parent=1 // pred_fallthru
      _
    // Predicated region
    $region30: #{tpu_custom_call.1} parent=1 // pred_check
      _
    $region31: #{tpu_custom_call.1} parent=1 // pred_check_branch
      %78 = sbr.rel (0) target = $region33
    $region32: #{tpu_custom_call.1} parent=1 // pred_region
      %s80 = ssub.s32 32, 32
      %81 = vsyncadd [#allocation9], %s80
      %s83 = sshll.u32 [#allocation8], 4
      %s84 = int_to_ptr.vmem [resolvable:$true] %s83
      %86 = dma.vmem_to_hbm [thread:$0]  %s84, 32, %s5, [#allocation9]
    $region33: #{tpu_custom_call.1} parent=1 // pred_fallthru
      _
    // Predicated region
    $region34: #{tpu_custom_call.1} parent=1 // pred_check
      _
    $region35: #{tpu_custom_call.1} parent=1 // pred_check_branch
      %88 = sbr.rel (0) target = $region37
    $region36: #{tpu_custom_call.1} parent=1 // pred_region
      %89 = dma.done [#allocation4], 32
    $region37: #{tpu_custom_call.1} parent=1 // pred_fallthru
      _
    // Predicated region
    $region38: #{tpu_custom_call.1} parent=1 // pred_check
      _
    $region39: #{tpu_custom_call.1} parent=1 // pred_check_branch
      %91 = sbr.rel (0) target = $region41
    $region40: #{tpu_custom_call.1} parent=1 // pred_region
      %92 = dma.done [#allocation9], 32
    $region41: #{tpu_custom_call.1} parent=1 // pred_fallthru
      _
    %93 = vsyncpa [#allocation3], 1
    %94 = vsyncpa [#allocation6], 1
    %95 = vsyncpa [#allocation4], 1
    %96 = vsyncpa [#allocation9], 1

</llo_original>
